<compile_context>
chip_gen: v5e
topology: v5e:2x2
jax: 0.10.0
libtpu: 0.0.40
codegen_flags: <defaults>
</compile_context>

<pallas_src>
import functools

import jax
import jax.numpy as jnp
from jax.experimental import pallas as pl
from jax.experimental.pallas import tpu as pltpu

MIN_VALUE = -0.33
MAX_VALUE = 0.33

OUT_FEATURES = 8
GROUP = 16            # batch elements packed into one 128-lane row (16 * 8 = 128)
LANES = 128


def linear_clamp_kernel(x_ref, e_ref, b_ref, o_ref):
    # x_ref: (bR, 16)   -- 16 batch elements per sublane row
    # e_ref: (16, 128)  -- expansion matrix with the weight folded in
    # b_ref: (1, 128)   -- bias tiled 16x
    # o_ref: (bR, 128)  -- bit-identical to row-major (16*bR, 8) output
    y = jnp.dot(
        x_ref[...],
        e_ref[...],
        precision=jax.lax.Precision.HIGHEST,
        preferred_element_type=jnp.float32,
    )                                   # (bR, 128): interleave + weight in one MXU pass
    y = y + b_ref[...]                  # bias
    y = jnp.maximum(y, MIN_VALUE)       # clamp_min
    y = jnp.minimum(y, MAX_VALUE)       # clamp_max
    o_ref[...] = y.astype(o_ref.dtype)


@functools.partial(jax.jit, static_argnames=("block_rows",))
def model_forward(x, weight, bias, *, block_rows=4096):
    """x: (N, 1) f32, weight: (8, 1) f32, bias: (8,) f32 -> (N, 8) f32."""
    n = x.shape[0]
    dtype = x.dtype

    # Pad batch to a multiple of 128 -> everything is (8, 128)-aligned.
    n_pad = pl.cdiv(n, LANES) * LANES
    x_flat = x.reshape(-1)
    if n_pad != n:
        x_flat = jnp.pad(x_flat, (0, n_pad - n))
    r_total = n_pad // GROUP
    x2d = x_flat.reshape(r_total, GROUP)                      # (N_pad/16, 16)

    # Block row count: full extent, or a multiple of 8 (partial last block OK).
    br = min(block_rows, r_total)
    if br != r_total:
        br = max(8, (br // 8) * 8)
    grid = pl.cdiv(r_total, br)

    # Resident params (built once in the wrapper, constant index_map).
    w_flat = weight.reshape(OUT_FEATURES).astype(dtype)       # (8,)
    lane = jnp.arange(LANES)
    grp = lane // OUT_FEATURES                                # which of the 16 slots
    feat = lane % OUT_FEATURES                                # which feature
    expand = (
        (jnp.arange(GROUP)[:, None] == grp[None, :]).astype(dtype)
        * w_flat[feat][None, :]
    )                                                         # (16, 128)
    b_tiled = jnp.tile(bias.astype(dtype), GROUP).reshape(1, LANES)

    out2d = pl.pallas_call(
        linear_clamp_kernel,
        out_shape=jax.ShapeDtypeStruct((r_total, LANES), dtype),
        grid=(grid,),
        in_specs=[
            pl.BlockSpec((br, GROUP), lambda i: (i, 0)),      # x tile
            pl.BlockSpec((GROUP, LANES), lambda i: (0, 0)),   # expansion (resident)
            pl.BlockSpec((1, LANES), lambda i: (0, 0)),       # bias (resident)
        ],
        out_specs=pl.BlockSpec((br, LANES), lambda i: (i, 0)),  # lane-dense stores
        compiler_params=pltpu.CompilerParams(
            dimension_semantics=("parallel",),                # v7x: shard across TCs
        ),
    )(x2d, expand, b_tiled)

    # Free reshape to row-major (N_pad, 8) + tail slice.
    return out2d.reshape(n_pad, OUT_FEATURES)[:n]


if __name__ == "__main__":
    key = jax.random.PRNGKey(0)
    kx, kw, kb = jax.random.split(key, 3)

    # Small shapes consistent with the module: x is (N, 1); use N=2.
    x = jax.random.normal(kx, (2, 1), dtype=jnp.float32)

    # Deterministic parameter init (PyTorch Linear-style uniform, bound 1/sqrt(1)=1).
    weight = jax.random.uniform(kw, (8, 1), dtype=jnp.float32, minval=-1.0, maxval=1.0)
    bias = jax.random.uniform(kb, (8,), dtype=jnp.float32, minval=-1.0, maxval=1.0)

    out = jax.block_until_ready(model_forward(x, weight, bias))
    ref = jnp.clip(x @ weight.T + bias, MIN_VALUE, MAX_VALUE)
    assert out.shape == (2, 8)
    assert jnp.allclose(out, ref, atol=1e-5), "mismatch vs reference (N=2)"

    # Padded path: non-multiple-of-128 batch, single block.
    x_big = jax.random.normal(kx, (300, 1), dtype=jnp.float32)
    out_big = jax.block_until_ready(model_forward(x_big, weight, bias))
    ref_big = jnp.clip(x_big @ weight.T + bias, MIN_VALUE, MAX_VALUE)
    assert out_big.shape == (300, 8)
    assert jnp.allclose(out_big, ref_big, atol=1e-5), "mismatch vs reference (N=300)"

    # Multi-block / partial-last-block path (grid of 2, second block partial).
    out_tiled = jax.block_until_ready(model_forward(x_big, weight, bias, block_rows=16))
    assert jnp.allclose(out_tiled, ref_big, atol=1e-5), "mismatch vs reference (tiled)"

    print("KERNEL_OK")
</pallas_src>

<mosaic_0001>
module attributes {stable_mosaic.version = 11 : i64} {
  func.func @linear_clamp_kernel(%arg0: i32, %arg1: memref<8x16xf32, #tpu.memory_space<vmem>>, %arg2: memref<16x128xf32, #tpu.memory_space<vmem>>, %arg3: memref<1x128xf32, #tpu.memory_space<vmem>>, %arg4: memref<8x128xf32, #tpu.memory_space<vmem>>) attributes {dimension_semantics = [#tpu.dimension_semantics<parallel>], iteration_bounds = array<i64: 1>, scalar_prefetch = 0 : i64, scratch_operands = 0 : i64, tpu.core_type = #tpu.core_type<tc>, window_params = [{transform_indices = @transform_0, window_bounds = array<i64: 8, 16>}, {pipeline_mode = #tpu.pipeline_mode<synchronous>, transform_indices = @transform_1, window_bounds = array<i64: 16, 128>}, {pipeline_mode = #tpu.pipeline_mode<synchronous>, transform_indices = @transform_2, window_bounds = array<i64: 1, 128>}, {transform_indices = @transform_3, window_bounds = array<i64: 8, 128>}]} {
    %c0 = arith.constant 0 : index
    %c0_0 = arith.constant 0 : index
    %0 = vector.load %arg1[%c0, %c0_0] : memref<8x16xf32, #tpu.memory_space<vmem>>, vector<8x16xf32>
    %c0_1 = arith.constant 0 : index
    %c0_2 = arith.constant 0 : index
    %1 = vector.load %arg2[%c0_1, %c0_2] : memref<16x128xf32, #tpu.memory_space<vmem>>, vector<16x128xf32>
    %cst = arith.constant dense<0.000000e+00> : vector<8x128xf32>
    %2 = tpu.matmul %0, %1, %cst {dimension_numbers = #tpu.dot_dimension_numbers<[1], [0], [0], [1], [0, 0, 1, 1], [], []>, precision = #tpu.contract_precision<fp32>} : vector<8x16xf32>, vector<16x128xf32>, vector<8x128xf32> -> vector<8x128xf32>
    %c0_3 = arith.constant 0 : index
    %c0_4 = arith.constant 0 : index
    %3 = vector.load %arg3[%c0_3, %c0_4] : memref<1x128xf32, #tpu.memory_space<vmem>>, vector<1x128xf32>
    %4 = vector.broadcast %3 : vector<1x128xf32> to vector<8x128xf32>
    %5 = arith.addf %2, %4 : vector<8x128xf32>
    %cst_5 = arith.constant -3.300000e-01 : f32
    %6 = vector.broadcast %cst_5 : f32 to vector<8x128xf32>
    %7 = arith.maximumf %5, %6 : vector<8x128xf32>
    %cst_6 = arith.constant 3.300000e-01 : f32
    %8 = vector.broadcast %cst_6 : f32 to vector<8x128xf32>
    %9 = arith.minimumf %7, %8 : vector<8x128xf32>
    %c0_7 = arith.constant 0 : index
    %c0_8 = arith.constant 0 : index
    %10 = vector.load %arg4[%c0_7, %c0_8] : memref<8x128xf32, #tpu.memory_space<vmem>>, vector<8x128xf32>
    tpu.vector_store %arg4[%c0_7, %c0_8], %9 {strides = array<i32>} : memref<8x128xf32, #tpu.memory_space<vmem>>, vector<8x128xf32>,
    return
  }
  func.func @transform_0(%arg0: i32) -> (i32, i32) {
    %c0_i32 = arith.constant 0 : i32
    %c0_i32_0 = arith.constant 0 : i32
    return %arg0, %c0_i32 : i32, i32
  }
  func.func @transform_1(%arg0: i32) -> (i32, i32) {
    %c0_i32 = arith.constant 0 : i32
    %c0_i32_0 = arith.constant 0 : i32
    %c0_i32_1 = arith.constant 0 : i32
    return %c0_i32, %c0_i32_0 : i32, i32
  }
  func.func @transform_2(%arg0: i32) -> (i32, i32) {
    %c0_i32 = arith.constant 0 : i32
    %c0_i32_0 = arith.constant 0 : i32
    %c0_i32_1 = arith.constant 0 : i32
    return %c0_i32, %c0_i32_0 : i32, i32
  }
  func.func @transform_3(%arg0: i32) -> (i32, i32) {
    %c0_i32 = arith.constant 0 : i32
    %c0_i32_0 = arith.constant 0 : i32
    return %arg0, %c0_i32 : i32, i32
  }
}

</mosaic_0001>

<llo_original>
// kernel: tile.8
$region0: #{tile.8}
  #allocation0 [shape = 's32[1]{0}', space=sflag, size = 0x4, scoped, tag = 'scoped memory for tile.8']
  %s0 = inlined_call_operand.vmem [shape: f32[8], index: 0, kind: input, shape index: {}]
  %s1 = inlined_call_operand.vmem [shape: f32[16,8], index: 1, kind: output, shape index: {}]
  // Predicated region
  $region2: #{tile.8} parent=0 // pred_check
    _
  $region3: #{tile.8} parent=0 // pred_check_branch
    %3 = sbr.rel (0) target = $region5
  $region4: #{tile.8} parent=0 // pred_region
    _
  $region5: #{tile.8} parent=0 // pred_fallthru
    _
  %v4 = vld [vmem:[%s0] ss:$0 sm:$0xff]
  %5 = vst [vmem:[%s1] sm:$0xff] %v4
  %s6 = scalar_lea.vmem %s1, 8
  %7 = vst [vmem:[%s6] sm:$0xff] %v4

// kernel: tile.9
$region0: #{tile.9}
  %s0 = inlined_call_operand.vmem [shape: f32[16,8], index: 0, kind: input, shape index: {}]
  %s1 = inlined_call_operand.vmem [shape: f32[1,128], index: 1, kind: output, shape index: {}]
  $region1: #{tile.9} parent=0
    #allocation0 [shape = 'u8[4096]{0}', space=vmem, size = 0x1000, scoped, tag = 'scoped mem for output reshape']
    %v2 = vld [vmem:[%s0] sm:$0x1]
    %vm3 = vcmask 64512
    %4 = vst.msk [vmem:[#allocation0] sm:$0x1] %vm3, %v2
    %s5 = scalar_lea.vmem %s0, 15
    %v6 = vld [vmem:[%s5] sm:$0x1]
    %7 = vrot.lane.b32.xlu0 %v6, 120
    %v8 = vpop.permute.xlu0 %7
    %vm9 = vcmask 1048512
    %10 = vst.msk [vmem:[#allocation0] sm:$0x1] %vm9, %v8
    %s11 = scalar_lea.vmem %s0, 14
    %v12 = vld [vmem:[%s11] sm:$0x1]
    %13 = vrot.lane.b32.xlu0 %v12, 112
    %v14 = vpop.permute.xlu0 %13
    %vm15 = vcmask 982912
    %16 = vst.msk [vmem:[#allocation0] sm:$0x1] %vm15, %v14
    %s17 = scalar_lea.vmem %s0, 13
    %v18 = vld [vmem:[%s17] sm:$0x1]
    %19 = vrot.lane.b32.xlu0 %v18, 104
    %v20 = vpop.permute.xlu0 %19
    %vm21 = vcmask 917312
    %22 = vst.msk [vmem:[#allocation0] sm:$0x1] %vm21, %v20
    %s23 = scalar_lea.vmem %s0, 12
    %v24 = vld [vmem:[%s23] sm:$0x1]
    %25 = vrot.lane.b32.xlu0 %v24, 96
    %v26 = vpop.permute.xlu0 %25
    %vm27 = vcmask 851712
    %28 = vst.msk [vmem:[#allocation0] sm:$0x1] %vm27, %v26
    %s29 = scalar_lea.vmem %s0, 11
    %v30 = vld [vmem:[%s29] sm:$0x1]
    %31 = vrot.lane.b32.xlu0 %v30, 88
    %v32 = vpop.permute.xlu0 %31
    %vm33 = vcmask 786112
    %34 = vst.msk [vmem:[#allocation0] sm:$0x1] %vm33, %v32
    %s35 = scalar_lea.vmem %s0, 10
    %v36 = vld [vmem:[%s35] sm:$0x1]
    %37 = vrot.lane.b32.xlu0 %v36, 80
    %v38 = vpop.permute.xlu0 %37
    %vm39 = vcmask 720512
    %40 = vst.msk [vmem:[#allocation0] sm:$0x1] %vm39, %v38
    %s41 = scalar_lea.vmem %s0, 9
    %v42 = vld [vmem:[%s41] sm:$0x1]
    %43 = vrot.lane.b32.xlu0 %v42, 72
    %v44 = vpop.permute.xlu0 %43
    %vm45 = vcmask 654912
    %46 = vst.msk [vmem:[#allocation0] sm:$0x1] %vm45, %v44
    %s47 = scalar_lea.vmem %s0, 8
    %v48 = vld [vmem:[%s47] sm:$0x1]
    %49 = vrot.lane.b32.xlu0 %v48, 64
    %v50 = vpop.permute.xlu0 %49
    %vm51 = vcmask 589312
    %52 = vst.msk [vmem:[#allocation0] sm:$0x1] %vm51, %v50
    %s53 = scalar_lea.vmem %s0, 7
    %v54 = vld [vmem:[%s53] sm:$0x1]
    %55 = vrot.lane.b32.xlu0 %v54, 56
    %v56 = vpop.permute.xlu0 %55
    %vm57 = vcmask 523712
    %58 = vst.msk [vmem:[#allocation0] sm:$0x1] %vm57, %v56
    %s59 = scalar_lea.vmem %s0, 6
    %v60 = vld [vmem:[%s59] sm:$0x1]
    %61 = vrot.lane.b32.xlu0 %v60, 48
    %v62 = vpop.permute.xlu0 %61
    %vm63 = vcmask 458112
    %64 = vst.msk [vmem:[#allocation0] sm:$0x1] %vm63, %v62
    %s65 = scalar_lea.vmem %s0, 5
    %v66 = vld [vmem:[%s65] sm:$0x1]
    %67 = vrot.lane.b32.xlu0 %v66, 40
    %v68 = vpop.permute.xlu0 %67
    %vm69 = vcmask 392512
    %70 = vst.msk [vmem:[#allocation0] sm:$0x1] %vm69, %v68
    %s71 = scalar_lea.vmem %s0, 4
    %v72 = vld [vmem:[%s71] sm:$0x1]
    %73 = vrot.lane.b32.xlu0 %v72, 32
    %v74 = vpop.permute.xlu0 %73
    %vm75 = vcmask 326912
    %76 = vst.msk [vmem:[#allocation0] sm:$0x1] %vm75, %v74
    %s77 = scalar_lea.vmem %s0, 3
    %v78 = vld [vmem:[%s77] sm:$0x1]
    %79 = vrot.lane.b32.xlu0 %v78, 24
    %v80 = vpop.permute.xlu0 %79
    %vm81 = vcmask 261312
    %82 = vst.msk [vmem:[#allocation0] sm:$0x1] %vm81, %v80
    %s83 = scalar_lea.vmem %s0, 2
    %v84 = vld [vmem:[%s83] sm:$0x1]
    %85 = vrot.lane.b32.xlu0 %v84, 16
    %v86 = vpop.permute.xlu0 %85
    %vm87 = vcmask 195712
    %88 = vst.msk [vmem:[#allocation0] sm:$0x1] %vm87, %v86
    %s89 = scalar_lea.vmem %s0, 1
    %v90 = vld [vmem:[%s89] sm:$0x1]
    %91 = vrot.lane.b32.xlu0 %v90, 8
    %v92 = vpop.permute.xlu0 %91
    %vm93 = vcmask 130112
    %94 = vst.msk [vmem:[#allocation0] sm:$0x1] %vm93, %v92
    %s96 = ssub.s32 2, 1
    %v97 = vld [vmem:[#allocation0] sm:%s96]
    %s99 = ssub.s32 2, 1
    %100 = vst [vmem:[%s1] sm:%s99] %v97

// kernel: model_forward.1
$region0: #{model_forward.1}
  #allocation0 [shape = 'u32[]', space=smem, size = 0x4, offset = 0x4, fixed_abs, tag = 'smem constant byte address 0x4 - core index']
  #allocation1 [shape = 'u32[72,128]{1,0:T(1,128)}', space=vmem, size = 0x9000, scoped, tag = 'internal scratch']
  %s0 = inlined_call_operand.vmem [shape: f32[8,16], index: 0, kind: input, shape index: {}]
  %s1 = inlined_call_operand.vmem [shape: f32[16,128], index: 1, kind: input, shape index: {}]
  %s2 = inlined_call_operand.vmem [shape: f32[1,128], index: 2, kind: input, shape index: {}]
  %s3 = inlined_call_operand.vmem [shape: f32[8,128], index: 3, kind: output, shape index: {}]
  %s4 = sld [smem:[#allocation0]]
  $region22: #{model_forward.1} parent=0
    _
  %s6 = ssub.s32 1, %s4
  %s7 = scalar_select 0, %s6, %s4
  // Predicated region
  $region2: #{model_forward.1} parent=0 // pred_check
    _
  $region3: #{model_forward.1} parent=0 // pred_check_branch
    %9 = sbr.rel (0) target = $region5
  $region4: #{model_forward.1} parent=0 // pred_region
    _
  $region5: #{model_forward.1} parent=0 // pred_fallthru
    _
  // Predicated region
  $region6: #{model_forward.1} parent=0 // pred_check
    _
  $region7: #{model_forward.1} parent=0 // pred_check_branch
    %11 = sbr.rel (0) target = $region9
  $region8: #{model_forward.1} parent=0 // pred_region
    _
  $region9: #{model_forward.1} parent=0 // pred_fallthru
    _
  // Predicated region
  $region10: #{model_forward.1} parent=0 // pred_check
    _
  $region11: #{model_forward.1} parent=0 // pred_check_branch
    %13 = sbr.rel (0) target = $region13
  $region12: #{model_forward.1} parent=0 // pred_region
    _
  $region13: #{model_forward.1} parent=0 // pred_fallthru
    _
  %v14 = vld [vmem:[%s0] sm:$0xff]
  %v15 = vld [vmem:[%s1] sm:$0xff]
  %v16 = vld [vmem:[%s1 + $0x8] sm:$0xff]
  %v17 = vld [vmem:[%s2] sm:$0x1]
  %v19 = vperm.slane %v17, 0
  %vm21 = vcmask 130048
  %v23 = vsel %vm21, %v14, 0
  %25 = vmatpush.msra.mxu0 0.0
  %26 = vmatpush.msra.mxu0 0.0
  %27 = vmatpush.msra.mxu0 0.0
  %28 = vmatpush.msra.mxu0 0.0
  %29 = vmatpush.msra.mxu0 0.0
  %30 = vmatpush.msra.mxu0 0.0
  %31 = vmatpush.msra.mxu0 0.0
  %32 = vmatpush.msra.mxu0 0.0
  %33 = vmatpush.msra.mxu0 0.0
  %34 = vmatpush.msra.mxu0 0.0
  %35 = vmatpush.msra.mxu0 0.0
  %36 = vmatpush.msra.mxu0 0.0
  %37 = vmatpush.msra.mxu0 0.0
  %38 = vmatpush.msra.mxu0 0.0
  %v39 = vand.u32 %v16, 4294901760
  %40 = vmatpush.msra.mxu0 %v39
  %v41 = vand.u32 %v15, 4294901760
  %42 = vmatpush.msra.mxu0 %v41
  %v43 = vand.u32 %v23, 4294901760
  %v44 = vsub.f32 %v23, %v43
  %v45 = vand.u32 %v44, 4294901760
  %v46 = vsub.f32 %v44, %v45
  %v47 = vand.u32 %v46, 4294901760
  %48 = vmatmul.f32.gmra.mxu0 %v47
  %v49 = vpop.f32.mrf.mxu0
  %v50 = vadd.f32 %v19, %v49
  %51 = vdwg.mxu0
  %52 = vmatpush.msra.mxu0 0.0
  %53 = vmatpush.msra.mxu0 0.0
  %54 = vmatpush.msra.mxu0 0.0
  %55 = vmatpush.msra.mxu0 0.0
  %56 = vmatpush.msra.mxu0 0.0
  %57 = vmatpush.msra.mxu0 0.0
  %58 = vmatpush.msra.mxu0 0.0
  %59 = vmatpush.msra.mxu0 0.0
  %60 = vmatpush.msra.mxu0 0.0
  %61 = vmatpush.msra.mxu0 0.0
  %62 = vmatpush.msra.mxu0 0.0
  %63 = vmatpush.msra.mxu0 0.0
  %64 = vmatpush.msra.mxu0 0.0
  %65 = vmatpush.msra.mxu0 0.0
  %v66 = vand.u32 %v16, 4294901760
  %v67 = vsub.f32 %v16, %v66
  %v68 = vand.u32 %v67, 4294901760
  %v69 = vsub.f32 %v67, %v68
  %v70 = vand.u32 %v69, 4294901760
  %71 = vmatpush.msra.mxu0 %v70
  %v72 = vand.u32 %v15, 4294901760
  %v73 = vsub.f32 %v15, %v72
  %v74 = vand.u32 %v73, 4294901760
  %v75 = vsub.f32 %v73, %v74
  %v76 = vand.u32 %v75, 4294901760
  %77 = vmatpush.msra.mxu0 %v76
  %v78 = vand.u32 %v23, 4294901760
  %79 = vmatmul.f32.gmra.mxu0 %v78
  %v80 = vpop.f32.mrf.mxu0
  %v81 = vadd.f32 %v50, %v80
  %82 = vdwg.mxu0
  %83 = vmatpush.msra.mxu0 0.0
  %84 = vmatpush.msra.mxu0 0.0
  %85 = vmatpush.msra.mxu0 0.0
  %86 = vmatpush.msra.mxu0 0.0
  %87 = vmatpush.msra.mxu0 0.0
  %88 = vmatpush.msra.mxu0 0.0
  %89 = vmatpush.msra.mxu0 0.0
  %90 = vmatpush.msra.mxu0 0.0
  %91 = vmatpush.msra.mxu0 0.0
  %92 = vmatpush.msra.mxu0 0.0
  %93 = vmatpush.msra.mxu0 0.0
  %94 = vmatpush.msra.mxu0 0.0
  %95 = vmatpush.msra.mxu0 0.0
  %96 = vmatpush.msra.mxu0 0.0
  %v97 = vand.u32 %v16, 4294901760
  %v98 = vsub.f32 %v16, %v97
  %99 = vmatpush.msra.mxu0 %v98
  %v100 = vand.u32 %v15, 4294901760
  %v101 = vsub.f32 %v15, %v100
  %102 = vmatpush.msra.mxu0 %v101
  %v103 = vand.u32 %v23, 4294901760
  %v104 = vsub.f32 %v23, %v103
  %105 = vmatmul.f32.gmra.mxu0 %v104
  %v106 = vpop.f32.mrf.mxu0
  %v107 = vadd.f32 %v81, %v106
  %108 = vdwg.mxu0
  %109 = vmatpush.msra.mxu0 0.0
  %110 = vmatpush.msra.mxu0 0.0
  %111 = vmatpush.msra.mxu0 0.0
  %112 = vmatpush.msra.mxu0 0.0
  %113 = vmatpush.msra.mxu0 0.0
  %114 = vmatpush.msra.mxu0 0.0
  %115 = vmatpush.msra.mxu0 0.0
  %116 = vmatpush.msra.mxu0 0.0
  %117 = vmatpush.msra.mxu0 0.0
  %118 = vmatpush.msra.mxu0 0.0
  %119 = vmatpush.msra.mxu0 0.0
  %120 = vmatpush.msra.mxu0 0.0
  %121 = vmatpush.msra.mxu0 0.0
  %122 = vmatpush.msra.mxu0 0.0
  %v123 = vand.u32 %v16, 4294901760
  %124 = vmatpush.msra.mxu0 %v123
  %v125 = vand.u32 %v15, 4294901760
  %126 = vmatpush.msra.mxu0 %v125
  %v127 = vand.u32 %v23, 4294901760
  %v128 = vsub.f32 %v23, %v127
  %v129 = vand.u32 %v128, 4294901760
  %130 = vmatmul.f32.gmra.mxu0 %v129
  %v131 = vpop.f32.mrf.mxu0
  %v132 = vadd.f32 %v107, %v131
  %133 = vdwg.mxu0
  %134 = vmatpush.msra.mxu0 0.0
  %135 = vmatpush.msra.mxu0 0.0
  %136 = vmatpush.msra.mxu0 0.0
  %137 = vmatpush.msra.mxu0 0.0
  %138 = vmatpush.msra.mxu0 0.0
  %139 = vmatpush.msra.mxu0 0.0
  %140 = vmatpush.msra.mxu0 0.0
  %141 = vmatpush.msra.mxu0 0.0
  %142 = vmatpush.msra.mxu0 0.0
  %143 = vmatpush.msra.mxu0 0.0
  %144 = vmatpush.msra.mxu0 0.0
  %145 = vmatpush.msra.mxu0 0.0
  %146 = vmatpush.msra.mxu0 0.0
  %147 = vmatpush.msra.mxu0 0.0
  %v148 = vand.u32 %v16, 4294901760
  %v149 = vsub.f32 %v16, %v148
  %v150 = vand.u32 %v149, 4294901760
  %151 = vmatpush.msra.mxu0 %v150
  %v152 = vand.u32 %v15, 4294901760
  %v153 = vsub.f32 %v15, %v152
  %v154 = vand.u32 %v153, 4294901760
  %155 = vmatpush.msra.mxu0 %v154
  %v156 = vand.u32 %v23, 4294901760
  %157 = vmatmul.f32.gmra.mxu0 %v156
  %v158 = vpop.f32.mrf.mxu0
  %v159 = vadd.f32 %v132, %v158
  %160 = vdwg.mxu0
  %161 = vmatpush.msra.mxu0 0.0
  %162 = vmatpush.msra.mxu0 0.0
  %163 = vmatpush.msra.mxu0 0.0
  %164 = vmatpush.msra.mxu0 0.0
  %165 = vmatpush.msra.mxu0 0.0
  %166 = vmatpush.msra.mxu0 0.0
  %167 = vmatpush.msra.mxu0 0.0
  %168 = vmatpush.msra.mxu0 0.0
  %169 = vmatpush.msra.mxu0 0.0
  %170 = vmatpush.msra.mxu0 0.0
  %171 = vmatpush.msra.mxu0 0.0
  %172 = vmatpush.msra.mxu0 0.0
  %173 = vmatpush.msra.mxu0 0.0
  %174 = vmatpush.msra.mxu0 0.0
  %v175 = vand.u32 %v16, 4294901760
  %176 = vmatpush.msra.mxu0 %v175
  %v177 = vand.u32 %v15, 4294901760
  %178 = vmatpush.msra.mxu0 %v177
  %v179 = vand.u32 %v23, 4294901760
  %180 = vmatmul.f32.gmra.mxu0 %v179
  %v181 = vpop.f32.mrf.mxu0
  %v182 = vadd.f32 %v159, %v181
  %183 = vdwg.mxu0
  %v184 = vmax.f32 %v182, -0.33
  %v185 = vmin.f32 %v184, 0.33
  %186 = vst [vmem:[%s3] sm:$0xff] %v185
  // Predicated region
  $region14: #{model_forward.1} parent=0 // pred_check
    _
  $region15: #{model_forward.1} parent=0 // pred_check_branch
    %188 = sbr.rel (0) target = $region17
  $region16: #{model_forward.1} parent=0 // pred_region
    _
  $region17: #{model_forward.1} parent=0 // pred_fallthru
    _
  // Predicated region
  $region18: #{model_forward.1} parent=0 // pred_check
    _
  $region19: #{model_forward.1} parent=0 // pred_check_branch
    %190 = sbr.rel (0) target = $region21
  $region20: #{model_forward.1} parent=0 // pred_region
    _
  $region21: #{model_forward.1} parent=0 // pred_fallthru
    _

</llo_original>
